<compile_context>
chip_gen: v5e
topology: v5e:2x2
jax: 0.10.0
libtpu: 0.0.40
codegen_flags: <defaults>
</compile_context>

<pallas_src>
import functools

import jax
import jax.numpy as jnp
from jax import lax
from jax.experimental import pallas as pl
from jax.experimental.pallas import tpu as pltpu


def _num_head_groups(hidden: int, nheads: int) -> int:
    """Largest divisor G of nheads whose per-group width (nheads//G)*D is a
    multiple of 128 (lane aligned); falls back to a single group."""
    head_dim = hidden // nheads
    for g in range(nheads, 0, -1):
        if nheads % g == 0 and ((nheads // g) * head_dim) % 128 == 0:
            return g
    return 1


def siglip_attention_kernel(x_ref, wqkv_ref, bqkv_ref, wo_ref, bo_ref,
                            o_ref, acc_ref, *, head_dim, heads_per_group):
    D = head_dim
    hpg = heads_per_group
    gw = hpg * D                       # q/k/v columns produced by this step
    g = pl.program_id(1)

    @pl.when(g == 0)
    def _init():
        acc_ref[...] = jnp.zeros_like(acc_ref)

    scale = 1.0 / (D ** 0.5)           # SDPA default: 1/sqrt(head_dim)

    x = x_ref[0].astype(jnp.bfloat16)                    # (T, C) bf16 MXU input
    wqkv = wqkv_ref[...]                                 # (C, 3*gw) bf16

    # One fused MXU matmul for this group's [q|k|v] columns, f32 accumulation.
    qkv = jnp.dot(x, wqkv, preferred_element_type=jnp.float32)
    qkv = qkv + bqkv_ref[0].astype(jnp.float32)          # (T, 3*gw) f32

    # Fold the scale into q once (T*gw muls, not H*T*T score muls).
    q = qkv[:, 0 * gw:1 * gw] * scale
    k = qkv[:, 1 * gw:2 * gw]
    v = qkv[:, 2 * gw:3 * gw]
    wo = wo_ref[...]                                     # (gw, C) bf16

    for h in range(hpg):                                 # static unroll (hpg small)
        sl = slice(h * D, (h + 1) * D)
        qh = q[:, sl].astype(jnp.bfloat16)               # (T, D)
        kh = k[:, sl].astype(jnp.bfloat16)               # (T, D)
        vh = v[:, sl].astype(jnp.bfloat16)               # (T, D)

        # scores: contraction on the lane axis (D) -> clean MXU shape, no
        # cross-lane relayout.
        s = lax.dot_general(qh, kh, (((1,), (1,)), ((), ())),
                            preferred_element_type=jnp.float32)      # (T, T) f32

        # numerically-stable softmax in f32; reciprocal goes to the EUP slot.
        m = jnp.max(s, axis=-1, keepdims=True)
        p = jnp.exp(s - m)
        denom = jnp.sum(p, axis=-1, keepdims=True)
        p = p * pl.reciprocal(denom, approx=True)

        yh = jnp.dot(p.astype(jnp.bfloat16), vh,
                     preferred_element_type=jnp.float32)             # (T, D) f32

        # Fused head-merge + out-projection contribution of this head.
        acc_ref[...] += jnp.dot(yh.astype(jnp.bfloat16), wo[sl, :],
                                preferred_element_type=jnp.float32)  # (T, C)

    @pl.when(g == pl.num_programs(1) - 1)
    def _finalize():
        o_ref[0] = (acc_ref[...] + bo_ref[0].astype(jnp.float32)).astype(o_ref.dtype)


def siglip_attention(x, params, nheads):
    """x: (B, T, C) float32.  params: dict of pre-transposed (in,out) weights."""
    B, T, C = x.shape
    assert C % nheads == 0
    D = C // nheads
    G = _num_head_groups(C, nheads)
    hpg = nheads // G
    gw = hpg * D

    # Fuse + group the QKV weights so grid step g streams one contiguous
    # (C, 3*gw) slab laid out [q_g | k_g | v_g].  Weights are cast to bf16 once
    # (MXU-native; halves weight DMA and VMEM), biases stay f32.
    wq, wk, wv, wo = params['wq'], params['wk'], params['wv'], params['wo']
    bq, bk, bv, bo = params['bq'], params['bk'], params['bv'], params['bo']
    w_blocks, b_blocks = [], []
    for g in range(G):
        sl = slice(g * gw, (g + 1) * gw)
        w_blocks += [wq[:, sl], wk[:, sl], wv[:, sl]]
        b_blocks += [bq[:, sl], bk[:, sl], bv[:, sl]]
    wqkv = jnp.concatenate(w_blocks, axis=1).astype(jnp.bfloat16)   # (C, 3C)
    bqkv = jnp.concatenate(b_blocks, axis=1)                        # (1, 3C) f32
    wo_bf16 = wo.astype(jnp.bfloat16)                               # (C, C)

    kernel = functools.partial(siglip_attention_kernel,
                               head_dim=D, heads_per_group=hpg)

    return pl.pallas_call(
        kernel,
        out_shape=jax.ShapeDtypeStruct((B, T, C), x.dtype),
        grid_spec=pltpu.PrefetchScalarGridSpec(
            num_scalar_prefetch=0,
            grid=(B, G),
            in_specs=[
                pl.BlockSpec((1, T, C), lambda b, g: (b, 0, 0)),     # x (reused over g)
                pl.BlockSpec((C, 3 * gw), lambda b, g: (0, g)),      # fused qkv slab
                pl.BlockSpec((1, 3 * gw), lambda b, g: (0, g)),      # fused qkv bias
                pl.BlockSpec((gw, C), lambda b, g: (g, 0)),          # out-proj row slab
                pl.BlockSpec((1, C), lambda b, g: (0, 0)),           # out-proj bias
            ],
            out_specs=pl.BlockSpec((1, T, C), lambda b, g: (b, 0, 0)),
            scratch_shapes=[pltpu.VMEM((T, C), jnp.float32)],        # f32 accumulator
        ),
        compiler_params=pltpu.CompilerParams(
            dimension_semantics=("parallel", "arbitrary"),
            vmem_limit_bytes=64 * 1024 * 1024,
        ),
    )(x, wqkv, bqkv, wo_bf16, bo)


def reference_attention(x, params, nheads):
    """Pure-JAX f32 reference matching the PyTorch forward."""
    B, T, C = x.shape
    D = C // nheads
    q = x @ params['wq'] + params['bq'][0]
    k = x @ params['wk'] + params['bk'][0]
    v = x @ params['wv'] + params['bv'][0]
    q = q.reshape(B, T, nheads, D).transpose(0, 2, 1, 3)
    k = k.reshape(B, T, nheads, D).transpose(0, 2, 1, 3)
    v = v.reshape(B, T, nheads, D).transpose(0, 2, 1, 3)
    scores = jnp.einsum('bhtd,bhsd->bhts', q, k) / (D ** 0.5)
    p = jax.nn.softmax(scores, axis=-1)
    y = jnp.einsum('bhts,bhsd->bhtd', p, v)
    y = y.transpose(0, 2, 1, 3).reshape(B, T, C)
    return y @ params['wo'] + params['bo'][0]


if __name__ == "__main__":
    # Small shapes consistent with the module (hidden/heads scaled down, with a
    # lane-aligned head_dim): batch=2, seq=32, hidden=256, heads=2 -> D=128.
    B, T, C, H = 2, 32, 256, 2

    key = jax.random.PRNGKey(0)
    keys = jax.random.split(key, 9)
    wscale = 1.0 / (C ** 0.5)

    params = {
        'wq': jax.random.normal(keys[0], (C, C), jnp.float32) * wscale,
        'bq': jax.random.normal(keys[1], (1, C), jnp.float32) * 0.01,
        'wk': jax.random.normal(keys[2], (C, C), jnp.float32) * wscale,
        'bk': jax.random.normal(keys[3], (1, C), jnp.float32) * 0.01,
        'wv': jax.random.normal(keys[4], (C, C), jnp.float32) * wscale,
        'bv': jax.random.normal(keys[5], (1, C), jnp.float32) * 0.01,
        'wo': jax.random.normal(keys[6], (C, C), jnp.float32) * wscale,
        'bo': jax.random.normal(keys[7], (1, C), jnp.float32) * 0.01,
    }
    x = jax.random.normal(keys[8], (B, T, C), jnp.float32)

    out = jax.block_until_ready(siglip_attention(x, params, H))
    ref = reference_attention(x, params, H)

    assert out.shape == (B, T, C)
    # bf16 MXU inputs with f32 accumulation vs. an all-f32 reference: tolerance
    # chosen to absorb bf16 rounding while still catching structural errors.
    assert jnp.allclose(out, ref, atol=5e-2, rtol=5e-2), "mismatch vs reference"
    print("KERNEL_OK")
</pallas_src>

<mosaic_0001>
module attributes {stable_mosaic.version = 11 : i64} {
  func.func @siglip_attention_kernel(%arg0: i32, %arg1: i32, %arg2: memref<1x32x256xf32, #tpu.memory_space<vmem>>, %arg3: memref<256x384xbf16, #tpu.memory_space<vmem>>, %arg4: memref<1x384xf32, #tpu.memory_space<vmem>>, %arg5: memref<128x256xbf16, #tpu.memory_space<vmem>>, %arg6: memref<1x256xf32, #tpu.memory_space<vmem>>, %arg7: memref<1x32x256xf32, #tpu.memory_space<vmem>>, %arg8: memref<32x256xf32, #tpu.memory_space<vmem>>) attributes {dimension_semantics = [#tpu.dimension_semantics<parallel>, #tpu.dimension_semantics<arbitrary>], iteration_bounds = array<i64: 2, 2>, scalar_prefetch = 0 : i64, scratch_operands = 1 : i64, tpu.core_type = #tpu.core_type<tc>, window_params = [{transform_indices = @transform_0, window_bounds = array<i64: 1, 32, 256>}, {transform_indices = @transform_1, window_bounds = array<i64: 256, 384>}, {transform_indices = @transform_2, window_bounds = array<i64: 1, 384>}, {transform_indices = @transform_3, window_bounds = array<i64: 128, 256>}, {pipeline_mode = #tpu.pipeline_mode<synchronous>, transform_indices = @transform_4, window_bounds = array<i64: 1, 256>}, {transform_indices = @transform_5, window_bounds = array<i64: 1, 32, 256>}]} {
    %c0_i32 = arith.constant 0 : i32
    %0 = arith.cmpi eq, %arg1, %c0_i32 : i32
    %1 = arith.extui %0 : i1 to i32
    %c0_i32_0 = arith.constant 0 : i32
    %2 = arith.cmpi ne, %1, %c0_i32_0 : i32
    scf.if %2 {
      %cst_20 = arith.constant 0.000000e+00 : f32
      %43 = vector.broadcast %cst_20 : f32 to vector<32x256xf32>
      %c0_21 = arith.constant 0 : index
      %c0_22 = arith.constant 0 : index
      %44 = vector.load %arg8[%c0_21, %c0_22] : memref<32x256xf32, #tpu.memory_space<vmem>>, vector<32x256xf32>
      tpu.vector_store %arg8[%c0_21, %c0_22], %43 {strides = array<i32>} : memref<32x256xf32, #tpu.memory_space<vmem>>, vector<32x256xf32>,
    } else {
    }
    %c0 = arith.constant 0 : index
    %c0_1 = arith.constant 0 : index
    %c0_2 = arith.constant 0 : index
    %3 = vector.load %arg2[%c0, %c0_1, %c0_2] : memref<1x32x256xf32, #tpu.memory_space<vmem>>, vector<1x32x256xf32>
    %4 = vector.shape_cast %3 : vector<1x32x256xf32> to vector<32x256xf32>
    %5 = arith.truncf %4 : vector<32x256xf32> to vector<32x256xbf16>
    %c0_3 = arith.constant 0 : index
    %c0_4 = arith.constant 0 : index
    %6 = vector.load %arg3[%c0_3, %c0_4] : memref<256x384xbf16, #tpu.memory_space<vmem>>, vector<256x384xbf16>
    %cst = arith.constant dense<0.000000e+00> : vector<32x384xf32>
    %7 = tpu.matmul %5, %6, %cst {dimension_numbers = #tpu.dot_dimension_numbers<[1], [0], [0], [1], [0, 0, 1, 1], [], []>} : vector<32x256xbf16>, vector<256x384xbf16>, vector<32x384xf32> -> vector<32x384xf32>
    %c0_5 = arith.constant 0 : index
    %c0_6 = arith.constant 0 : index
    %8 = vector.load %arg4[%c0_5, %c0_6] : memref<1x384xf32, #tpu.memory_space<vmem>>, vector<1x384xf32>
    %9 = vector.shape_cast %8 : vector<1x384xf32> to vector<384xf32>
    %10 = vector.shape_cast %9 : vector<384xf32> to vector<1x384xf32>
    %11 = vector.broadcast %10 : vector<1x384xf32> to vector<32x384xf32>
    %12 = arith.addf %7, %11 : vector<32x384xf32>
    %13 = vector.extract_strided_slice %12 {offsets = [0, 0], sizes = [32, 128], strides = [1, 1]} : vector<32x384xf32> to vector<32x128xf32>
    %cst_7 = arith.constant 0.0883883461 : f32
    %14 = vector.broadcast %cst_7 : f32 to vector<32x128xf32>
    %15 = arith.mulf %13, %14 : vector<32x128xf32>
    %16 = vector.extract_strided_slice %12 {offsets = [0, 128], sizes = [32, 128], strides = [1, 1]} : vector<32x384xf32> to vector<32x128xf32>
    %17 = vector.extract_strided_slice %12 {offsets = [0, 256], sizes = [32, 128], strides = [1, 1]} : vector<32x384xf32> to vector<32x128xf32>
    %c0_8 = arith.constant 0 : index
    %c0_9 = arith.constant 0 : index
    %18 = vector.load %arg5[%c0_8, %c0_9] : memref<128x256xbf16, #tpu.memory_space<vmem>>, vector<128x256xbf16>
    %19 = arith.truncf %15 : vector<32x128xf32> to vector<32x128xbf16>
    %20 = arith.truncf %16 : vector<32x128xf32> to vector<32x128xbf16>
    %21 = arith.truncf %17 : vector<32x128xf32> to vector<32x128xbf16>
    %cst_10 = arith.constant dense<0.000000e+00> : vector<32x32xf32>
    %22 = tpu.matmul %19, %20, %cst_10 {dimension_numbers = #tpu.dot_dimension_numbers<[1], [1], [0], [0], [0, 0, 1, 0], [], []>} : vector<32x128xbf16>, vector<32x128xbf16>, vector<32x32xf32> -> vector<32x32xf32>
    %cst_11 = arith.constant dense<0xFF800000> : vector<32xf32>
    %23 = vector.multi_reduction <maximumf>, %22, %cst_11 [1] : vector<32x32xf32> to vector<32xf32>
    %24 = vector.shape_cast %23 : vector<32xf32> to vector<32x1xf32>
    %25 = vector.broadcast %24 : vector<32x1xf32> to vector<32x32xf32>
    %26 = arith.subf %22, %25 : vector<32x32xf32>
    %27 = math.exp %26 : vector<32x32xf32>
    %cst_12 = arith.constant dense<0.000000e+00> : vector<32xf32>
    %28 = vector.multi_reduction <add>, %27, %cst_12 [1] : vector<32x32xf32> to vector<32xf32>
    %29 = vector.shape_cast %28 : vector<32xf32> to vector<32x1xf32>
    %30 = tpu.reciprocal %29 {approx = true} : vector<32x1xf32> -> vector<32x1xf32>
    %31 = vector.broadcast %30 : vector<32x1xf32> to vector<32x32xf32>
    %32 = arith.mulf %27, %31 : vector<32x32xf32>
    %33 = arith.truncf %32 : vector<32x32xf32> to vector<32x32xbf16>
    %cst_13 = arith.constant dense<0.000000e+00> : vector<32x128xf32>
    %34 = tpu.matmul %33, %21, %cst_13 {dimension_numbers = #tpu.dot_dimension_numbers<[1], [0], [0], [1], [0, 0, 1, 1], [], []>} : vector<32x32xbf16>, vector<32x128xbf16>, vector<32x128xf32> -> vector<32x128xf32>
    %c0_14 = arith.constant 0 : index
    %c0_15 = arith.constant 0 : index
    %35 = vector.load %arg8[%c0_14, %c0_15] : memref<32x256xf32, #tpu.memory_space<vmem>>, vector<32x256xf32>
    %36 = arith.truncf %34 : vector<32x128xf32> to vector<32x128xbf16>
    %cst_16 = arith.constant dense<0.000000e+00> : vector<32x256xf32>
    %37 = tpu.matmul %36, %18, %cst_16 {dimension_numbers = #tpu.dot_dimension_numbers<[1], [0], [0], [1], [0, 0, 1, 1], [], []>} : vector<32x128xbf16>, vector<128x256xbf16>, vector<32x256xf32> -> vector<32x256xf32>
    %38 = arith.addf %35, %37 : vector<32x256xf32>
    %c0_17 = arith.constant 0 : index
    %c0_18 = arith.constant 0 : index
    %39 = vector.load %arg8[%c0_17, %c0_18] : memref<32x256xf32, #tpu.memory_space<vmem>>, vector<32x256xf32>
    tpu.vector_store %arg8[%c0_17, %c0_18], %38 {strides = array<i32>} : memref<32x256xf32, #tpu.memory_space<vmem>>, vector<32x256xf32>,
    %c1_i32 = arith.constant 1 : i32
    %40 = arith.cmpi eq, %arg1, %c1_i32 : i32
    %41 = arith.extui %40 : i1 to i32
    %c0_i32_19 = arith.constant 0 : i32
    %42 = arith.cmpi ne, %41, %c0_i32_19 : i32
    scf.if %42 {
      %c0_20 = arith.constant 0 : index
      %c0_21 = arith.constant 0 : index
      %43 = vector.load %arg8[%c0_20, %c0_21] : memref<32x256xf32, #tpu.memory_space<vmem>>, vector<32x256xf32>
      %c0_22 = arith.constant 0 : index
      %c0_23 = arith.constant 0 : index
      %44 = vector.load %arg6[%c0_22, %c0_23] : memref<1x256xf32, #tpu.memory_space<vmem>>, vector<1x256xf32>
      %45 = vector.shape_cast %44 : vector<1x256xf32> to vector<256xf32>
      %46 = vector.shape_cast %45 : vector<256xf32> to vector<1x256xf32>
      %47 = vector.broadcast %46 : vector<1x256xf32> to vector<32x256xf32>
      %48 = arith.addf %43, %47 : vector<32x256xf32>
      %c0_24 = arith.constant 0 : index
      %c0_25 = arith.constant 0 : index
      %c0_26 = arith.constant 0 : index
      %49 = vector.load %arg7[%c0_24, %c0_25, %c0_26] : memref<1x32x256xf32, #tpu.memory_space<vmem>>, vector<1x32x256xf32>
      %50 = vector.shape_cast %49 : vector<1x32x256xf32> to vector<32x256xf32>
      %51 = vector.shape_cast %48 : vector<32x256xf32> to vector<1x32x256xf32>
      tpu.vector_store %arg7[%c0_24, %c0_25, %c0_26], %51 {strides = array<i32>} : memref<1x32x256xf32, #tpu.memory_space<vmem>>, vector<1x32x256xf32>,
    } else {
    }
    return
  }
  func.func @transform_0(%arg0: i32, %arg1: i32) -> (i32, i32, i32) {
    %c0_i32 = arith.constant 0 : i32
    %c0_i32_0 = arith.constant 0 : i32
    %c0_i32_1 = arith.constant 0 : i32
    return %arg0, %c0_i32, %c0_i32_0 : i32, i32, i32
  }
  func.func @transform_1(%arg0: i32, %arg1: i32) -> (i32, i32) {
    %c0_i32 = arith.constant 0 : i32
    %c0_i32_0 = arith.constant 0 : i32
    return %c0_i32, %arg1 : i32, i32
  }
  func.func @transform_2(%arg0: i32, %arg1: i32) -> (i32, i32) {
    %c0_i32 = arith.constant 0 : i32
    %c0_i32_0 = arith.constant 0 : i32
    return %c0_i32, %arg1 : i32, i32
  }
  func.func @transform_3(%arg0: i32, %arg1: i32) -> (i32, i32) {
    %c0_i32 = arith.constant 0 : i32
    %c0_i32_0 = arith.constant 0 : i32
    return %arg1, %c0_i32 : i32, i32
  }
  func.func @transform_4(%arg0: i32, %arg1: i32) -> (i32, i32) {
    %c0_i32 = arith.constant 0 : i32
    %c0_i32_0 = arith.constant 0 : i32
    %c0_i32_1 = arith.constant 0 : i32
    return %c0_i32, %c0_i32_0 : i32, i32
  }
  func.func @transform_5(%arg0: i32, %arg1: i32) -> (i32, i32, i32) {
    %c0_i32 = arith.constant 0 : i32
    %c0_i32_0 = arith.constant 0 : i32
    %c0_i32_1 = arith.constant 0 : i32
    return %arg0, %c0_i32, %c0_i32_0 : i32, i32, i32
  }
}

</mosaic_0001>

<llo_original>
// kernel: tpu_custom_call.1
$region0: #{tpu_custom_call.1}
  #allocation0 [shape = 'u32[]', space=smem, size = 0x4, offset = 0x4, fixed_abs, tag = 'smem constant byte address 0x4 - core index']
  #allocation1 [shape = 'u32[72,128]{1,0:T(1,128)}', space=vmem, size = 0x9000, scoped, tag = 'internal scratch']
  #allocation2 [shape = 'f32[32,256]{1,0:T(8,128)}', space=vmem, size = 0x8000, scoped, tag = 'scratch operand']
  %s0 = inlined_call_operand.hbm [shape: f32[2,32,256], index: 0, kind: input, shape index: {}]
  %s1 = inlined_call_operand.hbm [shape: bf16[256,768], index: 1, kind: input, shape index: {}]
  %s2 = inlined_call_operand.hbm [shape: f32[1,768], index: 2, kind: input, shape index: {}]
  %s3 = inlined_call_operand.hbm [shape: bf16[256,256], index: 3, kind: input, shape index: {}]
  %s4 = inlined_call_operand.vmem [shape: f32[1,256], index: 4, kind: input, shape index: {}]
  %s5 = inlined_call_operand.hbm [shape: f32[2,32,256], index: 5, kind: output, shape index: {}]
  %s6 = sld [smem:[#allocation0]]
  $region77: #{tpu_custom_call.1} parent=0
    _
  %s8 = ssub.s32 1, %s6
  %s9 = scalar_select 0, %s8, %s6
  $region1: #{tpu_custom_call.1} parent=0
    #allocation3 [shape = 'u8[65536]{0}', space=vmem, size = 0x10000, scoped, tag = 'input window, operand 0']
    #allocation4 [shape = 's32[2]{0}', space=sflag, size = 0x8, scoped, tag = 'scoped memory for tpu_custom_call.1']
    #allocation5 [shape = 's32[2]{0}', space=sflag, size = 0x8, scoped, tag = 'scoped memory for tpu_custom_call.1']
    #allocation6 [shape = 'u8[393216]{0}', space=vmem, size = 0x60000, scoped, tag = 'input window, operand 1']
    #allocation7 [shape = 's32[2]{0}', space=sflag, size = 0x8, scoped, tag = 'scoped memory for tpu_custom_call.1']
    #allocation8 [shape = 'u8[3072]{0}', space=vmem, size = 0xc00, scoped, tag = 'input window, operand 2']
    #allocation9 [shape = 'u8[131072]{0}', space=vmem, size = 0x20000, scoped, tag = 'input window, operand 3']
    #allocation10 [shape = 's32[2]{0}', space=sflag, size = 0x8, scoped, tag = 'scoped memory for tpu_custom_call.1']
    #allocation11 [shape = 'u8[65536]{0}', space=vmem, size = 0x10000, scoped, tag = 'output window, operand 0']
    %10 = vsyncpa [#allocation4], 0
    %s11 = scalar_lea.sflag [#allocation4], 1
    %12 = vsyncpa %s11, 0
    %13 = vsyncpa [#allocation7], 0
    %s14 = scalar_lea.sflag [#allocation7], 1
    %15 = vsyncpa %s14, 0
    %16 = vsyncpa [#allocation10], 0
    %s17 = scalar_lea.sflag [#allocation10], 1
    %18 = vsyncpa %s17, 0
    %19 = vsyncpa [#allocation5], 0
    %s20 = scalar_lea.sflag [#allocation5], 1
    %21 = vsyncpa %s20, 0
    loop: start=0, step=1, limit=6
    $region2: #{tpu_custom_call.1} parent=1 // loop_pre_header
      _
    $region3: #{tpu_custom_call.1} parent=1 // loop_header
      %s23 = sphi 0, %s27
      %p24 = scmp.ge.s32.totalorder %s23, 6
      %s30 = sphi 0, %s42
      %s31 = sphi 0, %s38
      %s32 = sphi 0, %s30
      %s33 = sphi 0, %s31
      %s34 = sphi 0, %s32
      %s35 = sphi 0, %s33
      %s45 = sphi 0, %s47
      %s48 = sphi 0, %s45
      %s49 = sphi 0, %s48
      %s65 = sphi 0, %s49
      %s71 = sphi 0, %s73
      %s74 = sphi 0, %s71
      %s75 = sphi 0, %s74
      %s91 = sphi 0, %s75
      %s97 = sphi 0, %s99
      %s100 = sphi 0, %s97
      %s101 = sphi 0, %s100
      %s117 = sphi 0, %s101
      %s123 = sphi 0, %s125
      %s126 = sphi 0, %s123
      %s127 = sphi 0, %s126
      %s143 = sphi 0, %s127
      %s147 = sphi 0, %s147
      %s149 = sphi 0, %s147
      %s150 = sphi 0, %s149
      %s164 = sphi 0, %s150
      %s170 = sphi 0, %s172
      %s173 = sphi 0, %s170
      %s174 = sphi 0, %s173
      %s190 = sphi 0, %s174
    $region4: #{tpu_custom_call.1} parent=1 // loop_header_branch
      %26 = sbr.rel (%p24) target = $region8
    $region5: #{tpu_custom_call.1} parent=1 // loop_body
      %s28 = ssub.s32 %s23, 1
      %s29 = ssub.s32 %s23, 2
      %s36 = sadd.s32 1, %s31
      %p37 = scmp.ge.s32.totalorder %s36, 2
      %s38 = scalar_select %p37, 0, %s36
      %s39 = sadd.s32 1, %s30
      %s40 = scalar_select %p37, %s39, %s30
      %p41 = scmp.ge.s32.totalorder %s40, 2
      %s42 = scalar_select %p41, 0, %s40
      %s43 = ssub.s32 %s30, %s42
      %p44 = scmp.eq.s32.totalorder %s43, 0
      %s46 = sadd.s32 %s45, 1
      %s47 = scalar_select %p44, %s45, %s46
      %p50 = pneg %p44
      %p51 = scmp.eq.s32.totalorder %s23, 3
      %p52 = por %p50, %p51
      %p53 = scmp.ne.s32.totalorder %s45, %s48
      %p54 = scmp.eq.s32.totalorder %s23, 0
      %p55 = por %p53, %p54
      %p56 = scmp.ne.s32.totalorder %s45, %s48
      %p57 = scmp.eq.s32.totalorder %s28, 3
      %p58 = por %p56, %p57
      %p59 = scmp.ne.s32.totalorder %s48, %s49
      %p60 = scmp.eq.s32.totalorder %s28, 0
      %p61 = por %p59, %p60
      %p62 = scmp.ne.s32.totalorder %s48, %s49
      %p63 = scmp.eq.s32.totalorder %s29, 3
      %p64 = por %p62, %p63
      %p66 = scmp.ne.s32.totalorder %s49, %s65
      %p67 = scmp.eq.s32.totalorder %s29, 0
      %p68 = por %p66, %p67
      %s69 = ssub.s32 %s31, %s38
      %p70 = scmp.eq.s32.totalorder %s69, 0
      %s72 = sadd.s32 %s71, 1
      %s73 = scalar_select %p70, %s71, %s72
      %p76 = pneg %p70
      %p77 = scmp.eq.s32.totalorder %s23, 3
      %p78 = por %p76, %p77
      %p79 = scmp.ne.s32.totalorder %s71, %s74
      %p80 = scmp.eq.s32.totalorder %s23, 0
      %p81 = por %p79, %p80
      %p82 = scmp.ne.s32.totalorder %s71, %s74
      %p83 = scmp.eq.s32.totalorder %s28, 3
      %p84 = por %p82, %p83
      %p85 = scmp.ne.s32.totalorder %s74, %s75
      %p86 = scmp.eq.s32.totalorder %s28, 0
      %p87 = por %p85, %p86
      %p88 = scmp.ne.s32.totalorder %s74, %s75
      %p89 = scmp.eq.s32.totalorder %s29, 3
      %p90 = por %p88, %p89
      %p92 = scmp.ne.s32.totalorder %s75, %s91
      %p93 = scmp.eq.s32.totalorder %s29, 0
      %p94 = por %p92, %p93
      %s95 = ssub.s32 %s31, %s38
      %p96 = scmp.eq.s32.totalorder %s95, 0
      %s98 = sadd.s32 %s97, 1
      %s99 = scalar_select %p96, %s97, %s98
      %p102 = pneg %p96
      %p103 = scmp.eq.s32.totalorder %s23, 3
      %p104 = por %p102, %p103
      %p105 = scmp.ne.s32.totalorder %s97, %s100
      %p106 = scmp.eq.s32.totalorder %s23, 0
      %p107 = por %p105, %p106
      %p108 = scmp.ne.s32.totalorder %s97, %s100
      %p109 = scmp.eq.s32.totalorder %s28, 3
      %p110 = por %p108, %p109
      %p111 = scmp.ne.s32.totalorder %s100, %s101
      %p112 = scmp.eq.s32.totalorder %s28, 0
      %p113 = por %p111, %p112
      %p114 = scmp.ne.s32.totalorder %s100, %s101
      %p115 = scmp.eq.s32.totalorder %s29, 3
      %p116 = por %p114, %p115
      %p118 = scmp.ne.s32.totalorder %s101, %s117
      %p119 = scmp.eq.s32.totalorder %s29, 0
      %p120 = por %p118, %p119
      %s121 = ssub.s32 %s31, %s38
      %p122 = scmp.eq.s32.totalorder %s121, 0
      %s124 = sadd.s32 %s123, 1
      %s125 = scalar_select %p122, %s123, %s124
      %p128 = pneg %p122
      %p129 = scmp.eq.s32.totalorder %s23, 3
      %p130 = por %p128, %p129
      %p131 = scmp.ne.s32.totalorder %s123, %s126
      %p132 = scmp.eq.s32.totalorder %s23, 0
      %p133 = por %p131, %p132
      %p134 = scmp.ne.s32.totalorder %s123, %s126
      %p135 = scmp.eq.s32.totalorder %s28, 3
      %p136 = por %p134, %p135
      %p137 = scmp.ne.s32.totalorder %s126, %s127
      %p138 = scmp.eq.s32.totalorder %s28, 0
      %p139 = por %p137, %p138
      %p140 = scmp.ne.s32.totalorder %s126, %s127
      %p141 = scmp.eq.s32.totalorder %s29, 3
      %p142 = por %p140, %p141
      %p144 = scmp.ne.s32.totalorder %s127, %s143
      %p145 = scmp.eq.s32.totalorder %s29, 0
      %p146 = por %p144, %p145
      %s148 = sadd.s32 %s147, 1
      %p151 = scmp.eq.s32.totalorder %s23, 3
      %p152 = scmp.ne.s32.totalorder %s147, %s149
      %p153 = scmp.eq.s32.totalorder %s23, 0
      %p154 = por %p152, %p153
      %p155 = scmp.ne.s32.totalorder %s147, %s149
      %p156 = scmp.eq.s32.totalorder %s28, 3
      %p157 = por %p155, %p156
      %p158 = scmp.ne.s32.totalorder %s149, %s150
      %p159 = scmp.eq.s32.totalorder %s28, 0
      %p160 = por %p158, %p159
      %p161 = scmp.ne.s32.totalorder %s149, %s150
      %p162 = scmp.eq.s32.totalorder %s29, 3
      %p163 = por %p161, %p162
      %p165 = scmp.ne.s32.totalorder %s150, %s164
      %p166 = scmp.eq.s32.totalorder %s29, 0
      %p167 = por %p165, %p166
      %s168 = ssub.s32 %s30, %s42
      %p169 = scmp.eq.s32.totalorder %s168, 0
      %s171 = sadd.s32 %s170, 1
      %s172 = scalar_select %p169, %s170, %s171
      %p175 = pneg %p169
      %p176 = scmp.eq.s32.totalorder %s23, 3
      %p177 = por %p175, %p176
      %p178 = scmp.ne.s32.totalorder %s170, %s173
      %p179 = scmp.eq.s32.totalorder %s23, 0
      %p180 = por %p178, %p179
      %p181 = scmp.ne.s32.totalorder %s170, %s173
      %p182 = scmp.eq.s32.totalorder %s28, 3
      %p183 = por %p181, %p182
      %p184 = scmp.ne.s32.totalorder %s173, %s174
      %p185 = scmp.eq.s32.totalorder %s28, 0
      %p186 = por %p184, %p185
      %p187 = scmp.ne.s32.totalorder %s173, %s174
      %p188 = scmp.eq.s32.totalorder %s29, 3
      %p189 = por %p187, %p188
      %p191 = scmp.ne.s32.totalorder %s174, %s190
      %p192 = scmp.eq.s32.totalorder %s29, 0
      %p193 = por %p191, %p192
      %p194 = scmp.le.s32.totalorder 1, %s23
      %p195 = scmp.lt.s32.totalorder %s23, 5
      %p196 = pnand %p194, %p195
      %p197 = pneg %p196
      // Predicated region
      $region9: #{tpu_custom_call.1} parent=5 // pred_check
        _
      $region10: #{tpu_custom_call.1} parent=5 // pred_check_branch
        %199 = sbr.rel (%p196) target = $region12
      $region11: #{tpu_custom_call.1} parent=5 // pred_region
        %s200 = ssub.s32 %s23, 1
        // Predicated region
        $region13: #{tpu_custom_call.1} parent=11 // pred_check
          %p201 = pneg %p160
        $region14: #{tpu_custom_call.1} parent=11 // pred_check_branch
          %203 = sbr.rel (%p201) target = $region16
        $region15: #{tpu_custom_call.1} parent=11 // pred_region
          _
        $region16: #{tpu_custom_call.1} parent=11 // pred_fallthru
          _
      $region12: #{tpu_custom_call.1} parent=5 // pred_fallthru
        _
      %p204 = scmp.lt.s32.totalorder %s23, 4
      // Predicated region
      $region17: #{tpu_custom_call.1} parent=5 // pred_check
        %p205 = pneg %p204
      $region18: #{tpu_custom_call.1} parent=5 // pred_check_branch
        %207 = sbr.rel (%p205) target = $region20
      $region19: #{tpu_custom_call.1} parent=5 // pred_region
        // Predicated region
        $region21: #{tpu_custom_call.1} parent=19 // pred_check
          %p208 = pneg %p55
        $region22: #{tpu_custom_call.1} parent=19 // pred_check_branch
          %210 = sbr.rel (%p208) target = $region24
        $region23: #{tpu_custom_call.1} parent=19 // pred_region
          %s211 = sand.u32 %s45, 1
          %s212 = scalar_lea.sflag [#allocation4], %s211
          %s213 = sand.u32 %s45, 1
          %s214 = smul.addr %s213, 64
          %s215 = scalar_lea.vmem [#allocation3], %s214
          %217 = vsyncadd %s212, 0
          %s218 = smul.addr %s30, 8
          %s219 = smul.addr %s218, 8
          %s220 = scalar_lea.hbm %s0, %s219
          %s221 = sshll.u32 %s220, 4
          %s222 = int_to_ptr.hbm [resolvable:$true] %s221
          %s223 = sshll.u32 %s215, 4
          %s224 = int_to_ptr.vmem [resolvable:$true] %s223
          %229 = dma.hbm_to_vmem [thread:$0]  %s222, 1024, %s224, %s212, 256, 256, 16
        $region24: #{tpu_custom_call.1} parent=19 // pred_fallthru
          _
        // Predicated region
        $region25: #{tpu_custom_call.1} parent=19 // pred_check
          %p230 = pneg %p81
        $region26: #{tpu_custom_call.1} parent=19 // pred_check_branch
          %232 = sbr.rel (%p230) target = $region28
        $region27: #{tpu_custom_call.1} parent=19 // pred_region
          %s233 = sand.u32 %s23, 1
          %s234 = scalar_lea.sflag [#allocation7], %s233
          %s235 = sand.u32 %s71, 1
          %s236 = smul.addr %s235, 384
          %s237 = scalar_lea.vmem [#allocation6], %s236
          %s238 = smul.u32 3, %s31
          %240 = vsyncadd %s234, 0
          %s241 = smul.addr %s238, 4
          %s242 = scalar_lea.hbm %s1, %s241
          %s243 = sshll.u32 %s242, 4
          %s244 = int_to_ptr.hbm [resolvable:$true] %s243
          %s245 = sshll.u32 %s237, 4
          %s246 = int_to_ptr.vmem [resolvable:$true] %s245
          %251 = dma.hbm_to_vmem [thread:$0]  %s244, 6144, %s246, %s234, 384, 192, 12
        $region28: #{tpu_custom_call.1} parent=19 // pred_fallthru
          _
        // Predicated region
        $region29: #{tpu_custom_call.1} parent=19 // pred_check
          %p252 = pneg %p107
        $region30: #{tpu_custom_call.1} parent=19 // pred_check_branch
          %254 = sbr.rel (%p252) target = $region32
        $region31: #{tpu_custom_call.1} parent=19 // pred_region
          %s255 = sand.u32 %s23, 1
          %s256 = scalar_lea.sflag [#allocation7], %s255
          %s257 = sand.u32 %s97, 1
          %s258 = smul.addr %s257, 3
          %s259 = scalar_lea.vmem [#allocation8], %s258
          %s260 = smul.u32 3, %s31
          %262 = vsyncadd %s256, 0
          %s263 = scalar_lea.hbm %s2, %s260
          %s265 = sshll.u32 %s263, 4
          %s266 = int_to_ptr.hbm [resolvable:$true] %s265
          %s267 = sshll.u32 %s259, 4
          %s268 = int_to_ptr.vmem [resolvable:$true] %s267
          %270 = dma.hbm_to_vmem [thread:$0]  %s266, 48, %s268, %s256
        $region32: #{tpu_custom_call.1} parent=19 // pred_fallthru
          _
        // Predicated region
        $region33: #{tpu_custom_call.1} parent=19 // pred_check
          %p271 = pneg %p133
        $region34: #{tpu_custom_call.1} parent=19 // pred_check_branch
          %273 = sbr.rel (%p271) target = $region36
        $region35: #{tpu_custom_call.1} parent=19 // pred_region
          %s274 = sand.u32 %s123, 1
          %s275 = scalar_lea.sflag [#allocation10], %s274
          %s276 = sand.u32 %s123, 1
          %s277 = smul.addr %s276, 128
          %s278 = scalar_lea.vmem [#allocation9], %s277
          %s279 = smul.u32 16, %s31
          %281 = vsyncadd %s275, 0
          %s282 = smul.addr %s279, 2
          %s283 = smul.addr %s282, 4
          %s284 = scalar_lea.hbm %s3, %s283
          %s285 = sshll.u32 %s284, 4
          %s286 = int_to_ptr.hbm [resolvable:$true] %s285
          %s287 = sshll.u32 %s278, 4
          %s288 = int_to_ptr.vmem [resolvable:$true] %s287
          %293 = dma.hbm_to_vmem [thread:$0]  %s286, 2048, %s288, %s275, 128, 128, 8
        $region36: #{tpu_custom_call.1} parent=19 // pred_fallthru
          _
      $region20: #{tpu_custom_call.1} parent=5 // pred_fallthru
        _
      %p294 = scmp.le.s32.totalorder 1, %s23
      %p295 = scmp.lt.s32.totalorder %s23, 5
      %p296 = pnand %p294, %p295
      %p297 = pneg %p296
      // Predicated region
      $region37: #{tpu_custom_call.1} parent=5 // pred_check
        _
      $region38: #{tpu_custom_call.1} parent=5 // pred_check_branch
        %299 = sbr.rel (%p296) target = $region40
      $region39: #{tpu_custom_call.1} parent=5 // pred_region
        %s300 = ssub.s32 %s23, 1
        %s301 = sand.u32 %s48, 1
        %s302 = scalar_lea.sflag [#allocation4], %s301
        %s303 = sand.u32 %s48, 1
        %s304 = smul.addr %s303, 64
        %s305 = scalar_lea.vmem [#allocation3], %s304
        // Predicated region
        $region41: #{tpu_custom_call.1} parent=39 // pred_check
          %p306 = pneg %p61
        $region42: #{tpu_custom_call.1} parent=39 // pred_check_branch
          %308 = sbr.rel (%p306) target = $region44
        $region43: #{tpu_custom_call.1} parent=39 // pred_region
          %310 = dma.done %s302, 1024
        $region44: #{tpu_custom_call.1} parent=39 // pred_fallthru
          _
        %s311 = sand.u32 %s28, 1
        %s312 = scalar_lea.sflag [#allocation7], %s311
        %s313 = sand.u32 %s74, 1
        %s314 = smul.addr %s313, 384
        %s315 = scalar_lea.vmem [#allocation6], %s314
        // Predicated region
        $region45: #{tpu_custom_call.1} parent=39 // pred_check
          %p316 = pneg %p87
        $region46: #{tpu_custom_call.1} parent=39 // pred_check_branch
          %318 = sbr.rel (%p316) target = $region48
        $region47: #{tpu_custom_call.1} parent=39 // pred_region
          %320 = dma.done %s312, 6144
        $region48: #{tpu_custom_call.1} parent=39 // pred_fallthru
          _
        %s321 = sand.u32 %s28, 1
        %s322 = scalar_lea.sflag [#allocation7], %s321
        %s323 = sand.u32 %s100, 1
        %s324 = smul.addr %s323, 3
        %s325 = scalar_lea.vmem [#allocation8], %s324
        // Predicated region
        $region49: #{tpu_custom_call.1} parent=39 // pred_check
          %p326 = pneg %p113
        $region50: #{tpu_custom_call.1} parent=39 // pred_check_branch
          %328 = sbr.rel (%p326) target = $region52
        $region51: #{tpu_custom_call.1} parent=39 // pred_region
          %330 = dma.done %s322, 48
        $region52: #{tpu_custom_call.1} parent=39 // pred_fallthru
          _
        %s331 = sand.u32 %s126, 1
        %s332 = scalar_lea.sflag [#allocation10], %s331
        %s333 = sand.u32 %s126, 1
        %s334 = smul.addr %s333, 128
        %s335 = scalar_lea.vmem [#allocation9], %s334
        // Predicated region
        $region53: #{tpu_custom_call.1} parent=39 // pred_check
          %p336 = pneg %p139
        $region54: #{tpu_custom_call.1} parent=39 // pred_check_branch
          %338 = sbr.rel (%p336) target = $region56
        $region55: #{tpu_custom_call.1} parent=39 // pred_region
          %340 = dma.done %s332, 2048
        $region56: #{tpu_custom_call.1} parent=39 // pred_fallthru
          _
        %s341 = sand.u32 %s48, 1
        %s342 = scalar_lea.sflag [#allocation4], %s341
        %s343 = sand.u32 %s48, 1
        %s344 = smul.addr %s343, 64
        %s345 = scalar_lea.vmem [#allocation3], %s344
        %p346 = pneg %p61
        %p347 = pneg %p58
        %s348 = sand.u32 %s28, 1
        %s349 = scalar_lea.sflag [#allocation7], %s348
        %s350 = sand.u32 %s74, 1
        %s351 = smul.addr %s350, 384
        %s352 = scalar_lea.vmem [#allocation6], %s351
        %p353 = pneg %p87
        %p354 = pneg %p84
        %s355 = sand.u32 %s28, 1
        %s356 = scalar_lea.sflag [#allocation7], %s355
        %s357 = sand.u32 %s100, 1
        %s358 = smul.addr %s357, 3
        %s359 = scalar_lea.vmem [#allocation8], %s358
        %p360 = pneg %p113
        %p361 = pneg %p110
        %s362 = sand.u32 %s126, 1
        %s363 = scalar_lea.sflag [#allocation10], %s362
        %s364 = sand.u32 %s126, 1
        %s365 = smul.addr %s364, 128
        %s366 = scalar_lea.vmem [#allocation9], %s365
        %p367 = pneg %p139
        %p368 = pneg %p136
        %p369 = pneg %p160
        %p370 = pneg %p157
        %p371 = pneg %p186
        %p372 = pneg %p183
        %s373 = sand.u32 %s173, 1
        %s374 = scalar_lea.sflag [#allocation5], %s373
        %s375 = sand.u32 %s173, 1
        %s376 = smul.addr %s375, 64
        %s377 = scalar_lea.vmem [#allocation11], %s376
        %s378 = smul.u32 3, %s33
        %s379 = smul.u32 3, %s33
        %s380 = smul.u32 16, %s33
        %p382 = scmp.eq.s32.totalorder %s33, 0
        // Predicated region
        $region57: #{tpu_custom_call.1} parent=39 // pred_check
          %p383 = pneg %p382
        $region58: #{tpu_custom_call.1} parent=39 // pred_check_branch
          %385 = sbr.rel (%p383) target = $region60
        $region59: #{tpu_custom_call.1} parent=39 // pred_region
          %386 = vst [vmem:[#allocation2] sm:$0xff] 0.0
          %387 = vst [vmem:[#allocation2 + $0x8] sm:$0xff] 0.0
          %388 = vst [vmem:[#allocation2 + $0x10] sm:$0xff] 0.0
          %389 = vst [vmem:[#allocation2 + $0x18] sm:$0xff] 0.0
          %390 = vst [vmem:[#allocation2 + $0x20] sm:$0xff] 0.0
          %391 = vst [vmem:[#allocation2 + $0x28] sm:$0xff] 0.0
          %392 = vst [vmem:[#allocation2 + $0x30] sm:$0xff] 0.0
          %393 = vst [vmem:[#allocation2 + $0x38] sm:$0xff] 0.0
        $region60: #{tpu_custom_call.1} parent=39 // pred_fallthru
          _
        %v394 = vld [vmem:[%s305] sm:$0xff]
        %v395 = vld [vmem:[%s305 + $0x8] sm:$0xff]
        %v396 = vld [vmem:[%s305 + $0x10] sm:$0xff]
        %v397 = vld [vmem:[%s305 + $0x18] sm:$0xff]
        %v398 = vld [vmem:[%s305 + $0x20] sm:$0xff]
        %v399 = vld [vmem:[%s305 + $0x28] sm:$0xff]
        %v400 = vld [vmem:[%s305 + $0x30] sm:$0xff]
        %v401 = vld [vmem:[%s305 + $0x38] sm:$0xff]
        %v402 = vpack.c.bf16 %v396, %v394
        %v403 = vpack.c.bf16 %v397, %v395
        %v404 = vpack.c.bf16 %v400, %v398
        %v405 = vpack.c.bf16 %v401, %v399
        %v406 = vld [vmem:[%s315] sm:$0xff]
        %v407 = vld [vmem:[%s315 + $0x8] sm:$0xf]
        %v408 = vld [vmem:[%s315 + $0xc] sm:$0xff]
        %v409 = vld [vmem:[%s315 + $0x14] sm:$0xf]
        %v410 = vld [vmem:[%s315 + $0x18] sm:$0xff]
        %v411 = vld [vmem:[%s315 + $0x20] sm:$0xf]
        %v412 = vld [vmem:[%s315 + $0x24] sm:$0xff]
        %v413 = vld [vmem:[%s315 + $0x2c] sm:$0xf]
        %v414 = vld [vmem:[%s315 + $0x30] sm:$0xff]
        %v415 = vld [vmem:[%s315 + $0x38] sm:$0xf]
        %v416 = vld [vmem:[%s315 + $0x3c] sm:$0xff]
        %v417 = vld [vmem:[%s315 + $0x44] sm:$0xf]
        %v418 = vld [vmem:[%s315 + $0x48] sm:$0xff]
        %v419 = vld [vmem:[%s315 + $0x50] sm:$0xf]
        %v420 = vld [vmem:[%s315 + $0x54] sm:$0xff]
        %v421 = vld [vmem:[%s315 + $0x5c] sm:$0xf]
        %v422 = vld [vmem:[%s315 + $0x60] sm:$0xff]
        %v423 = vld [vmem:[%s315 + $0x68] sm:$0xf]
        %v424 = vld [vmem:[%s315 + $0x6c] sm:$0xff]
        %v425 = vld [vmem:[%s315 + $0x74] sm:$0xf]
        %v426 = vld [vmem:[%s315 + $0x78] sm:$0xff]
        %v427 = vld [vmem:[%s315 + $0x80] sm:$0xf]
        %v428 = vld [vmem:[%s315 + $0x84] sm:$0xff]
        %v429 = vld [vmem:[%s315 + $0x8c] sm:$0xf]
        %v430 = vld [vmem:[%s315 + $0x90] sm:$0xff]
        %v431 = vld [vmem:[%s315 + $0x98] sm:$0xf]
        %v432 = vld [vmem:[%s315 + $0x9c] sm:$0xff]
        %v433 = vld [vmem:[%s315 + $0xa4] sm:$0xf]
        %v434 = vld [vmem:[%s315 + $0xa8] sm:$0xff]
        %v435 = vld [vmem:[%s315 + $0xb0] sm:$0xf]
        %v436 = vld [vmem:[%s315 + $0xb4] sm:$0xff]
        %v437 = vld [vmem:[%s315 + $0xbc] sm:$0xf]
        %v438 = vld [vmem:[%s315 + $0xc0] sm:$0xff]
        %v439 = vld [vmem:[%s315 + $0xc8] sm:$0xf]
        %v440 = vld [vmem:[%s315 + $0xcc] sm:$0xff]
        %v441 = vld [vmem:[%s315 + $0xd4] sm:$0xf]
        %v442 = vld [vmem:[%s315 + $0xd8] sm:$0xff]
        %v443 = vld [vmem:[%s315 + $0xe0] sm:$0xf]
        %v444 = vld [vmem:[%s315 + $0xe4] sm:$0xff]
        %v445 = vld [vmem:[%s315 + $0xec] sm:$0xf]
        %v446 = vld [vmem:[%s315 + $0xf0] sm:$0xff]
        %v447 = vld [vmem:[%s315 + $0xf8] sm:$0xf]
        %v448 = vld [vmem:[%s315 + $0xfc] sm:$0xff]
        %v449 = vld [vmem:[%s315 + $0x104] sm:$0xf]
        %v450 = vld [vmem:[%s315 + $0x108] sm:$0xff]
        %v451 = vld [vmem:[%s315 + $0x110] sm:$0xf]
        %v452 = vld [vmem:[%s315 + $0x114] sm:$0xff]
        %v453 = vld [vmem:[%s315 + $0x11c] sm:$0xf]
        %v454 = vld [vmem:[%s315 + $0x120] sm:$0xff]
        %v455 = vld [vmem:[%s315 + $0x128] sm:$0xf]
        %v456 = vld [vmem:[%s315 + $0x12c] sm:$0xff]
        %v457 = vld [vmem:[%s315 + $0x134] sm:$0xf]
        %v458 = vld [vmem:[%s315 + $0x138] sm:$0xff]
        %v459 = vld [vmem:[%s315 + $0x140] sm:$0xf]
        %v460 = vld [vmem:[%s315 + $0x144] sm:$0xff]
        %v461 = vld [vmem:[%s315 + $0x14c] sm:$0xf]
        %v462 = vld [vmem:[%s315 + $0x150] sm:$0xff]
        %v463 = vld [vmem:[%s315 + $0x158] sm:$0xf]
        %v464 = vld [vmem:[%s315 + $0x15c] sm:$0xff]
        %v465 = vld [vmem:[%s315 + $0x164] sm:$0xf]
        %v466 = vld [vmem:[%s315 + $0x168] sm:$0xff]
        %v467 = vld [vmem:[%s315 + $0x170] sm:$0xf]
        %v468 = vld [vmem:[%s315 + $0x174] sm:$0xff]
        %v469 = vld [vmem:[%s315 + $0x17c] sm:$0xf]
        %v470 = vld [vmem:[%s325] sm:$0x7]
        %v472 = vperm.slane %v470, 0
        %v473 = vperm.slane %v470, 1
        %v474 = vperm.slane %v470, 2
        %v542 = vunpack.c.l.b16 %v406
        %v543 = vunpack.c.h.b16 %v406
        %v544 = vunpack.c.l.b16 %v407
        %v545 = vunpack.c.l.b16 %v408
        %v546 = vunpack.c.h.b16 %v408
        %v547 = vunpack.c.l.b16 %v409
        %v548 = vunpack.c.l.b16 %v410
        %v549 = vunpack.c.h.b16 %v410
        %v550 = vunpack.c.l.b16 %v411
        %v551 = vunpack.c.l.b16 %v412
        %v552 = vunpack.c.h.b16 %v412
        %v553 = vunpack.c.l.b16 %v413
        %v554 = vunpack.c.l.b16 %v414
        %v555 = vunpack.c.h.b16 %v414
        %v556 = vunpack.c.l.b16 %v415
        %v557 = vunpack.c.l.b16 %v416
        %v558 = vunpack.c.h.b16 %v416
        %v559 = vunpack.c.l.b16 %v417
        %v560 = vunpack.c.l.b16 %v418
        %v561 = vunpack.c.h.b16 %v418
        %v562 = vunpack.c.l.b16 %v419
        %v563 = vunpack.c.l.b16 %v420
        %v564 = vunpack.c.h.b16 %v420
        %v565 = vunpack.c.l.b16 %v421
        %v566 = vunpack.c.l.b16 %v422
        %v567 = vunpack.c.h.b16 %v422
        %v568 = vunpack.c.l.b16 %v423
        %v569 = vunpack.c.l.b16 %v424
        %v570 = vunpack.c.h.b16 %v424
        %v571 = vunpack.c.l.b16 %v425
        %v572 = vunpack.c.l.b16 %v426
        %v573 = vunpack.c.h.b16 %v426
        %v574 = vunpack.c.l.b16 %v427
        %v575 = vunpack.c.l.b16 %v428
        %v576 = vunpack.c.h.b16 %v428
        %v577 = vunpack.c.l.b16 %v429
        %v578 = vunpack.c.l.b16 %v430
        %v579 = vunpack.c.h.b16 %v430
        %v580 = vunpack.c.l.b16 %v431
        %v581 = vunpack.c.l.b16 %v432
        %v582 = vunpack.c.h.b16 %v432
        %v583 = vunpack.c.l.b16 %v433
        %v584 = vunpack.c.l.b16 %v434
        %v585 = vunpack.c.h.b16 %v434
        %v586 = vunpack.c.l.b16 %v435
        %v587 = vunpack.c.l.b16 %v436
        %v588 = vunpack.c.h.b16 %v436
        %v589 = vunpack.c.l.b16 %v437
        %v590 = vunpack.c.l.b16 %v438
        %v591 = vunpack.c.h.b16 %v438
        %v592 = vunpack.c.l.b16 %v439
        %v593 = vunpack.c.l.b16 %v440
        %v594 = vunpack.c.h.b16 %v440
        %v595 = vunpack.c.l.b16 %v441
        %v596 = vunpack.c.l.b16 %v442
        %v597 = vunpack.c.h.b16 %v442
        %v598 = vunpack.c.l.b16 %v443
        %v599 = vunpack.c.l.b16 %v444
        %v600 = vunpack.c.h.b16 %v444
        %v601 = vunpack.c.l.b16 %v445
        %v602 = vunpack.c.l.b16 %v446
        %v603 = vunpack.c.h.b16 %v446
        %v604 = vunpack.c.l.b16 %v447
        %v605 = vunpack.c.l.b16 %v448
        %v606 = vunpack.c.h.b16 %v448
        %v607 = vunpack.c.l.b16 %v449
        %v608 = vunpack.c.l.b16 %v450
        %v609 = vunpack.c.h.b16 %v450
        %v610 = vunpack.c.l.b16 %v451
        %v611 = vunpack.c.l.b16 %v452
        %v612 = vunpack.c.h.b16 %v452
        %v613 = vunpack.c.l.b16 %v453
        %v614 = vunpack.c.l.b16 %v454
        %v615 = vunpack.c.h.b16 %v454
        %v616 = vunpack.c.l.b16 %v455
        %v617 = vunpack.c.l.b16 %v456
        %v618 = vunpack.c.h.b16 %v456
        %v619 = vunpack.c.l.b16 %v457
        %v620 = vunpack.c.l.b16 %v458
        %v621 = vunpack.c.h.b16 %v458
        %v622 = vunpack.c.l.b16 %v459
        %v623 = vunpack.c.l.b16 %v460
        %v624 = vunpack.c.h.b16 %v460
        %v625 = vunpack.c.l.b16 %v461
        %v626 = vunpack.c.l.b16 %v462
        %v627 = vunpack.c.h.b16 %v462
        %v628 = vunpack.c.l.b16 %v463
        %v629 = vunpack.c.l.b16 %v464
        %v630 = vunpack.c.h.b16 %v464
        %v631 = vunpack.c.l.b16 %v465
        %v632 = vunpack.c.l.b16 %v466
        %v633 = vunpack.c.h.b16 %v466
        %v634 = vunpack.c.l.b16 %v467
        %v635 = vunpack.c.l.b16 %v468
        %v636 = vunpack.c.h.b16 %v468
        %v637 = vunpack.c.l.b16 %v469
        %v638 = vpack.c.b16 %v545, %v542
        %v639 = vpack.c.b16 %v546, %v543
        %v640 = vpack.c.b16 %v547, %v544
        %v641 = vpack.c.b16 %v551, %v548
        %v642 = vpack.c.b16 %v552, %v549
        %v643 = vpack.c.b16 %v553, %v550
        %v644 = vpack.c.b16 %v557, %v554
        %v645 = vpack.c.b16 %v558, %v555
        %v646 = vpack.c.b16 %v559, %v556
        %v647 = vpack.c.b16 %v563, %v560
        %v648 = vpack.c.b16 %v564, %v561
        %v649 = vpack.c.b16 %v565, %v562
        %v650 = vpack.c.b16 %v569, %v566
        %v651 = vpack.c.b16 %v570, %v567
        %v652 = vpack.c.b16 %v571, %v568
        %v653 = vpack.c.b16 %v575, %v572
        %v654 = vpack.c.b16 %v576, %v573
        %v655 = vpack.c.b16 %v577, %v574
        %v656 = vpack.c.b16 %v581, %v578
        %v657 = vpack.c.b16 %v582, %v579
        %v658 = vpack.c.b16 %v583, %v580
        %v659 = vpack.c.b16 %v587, %v584
        %v660 = vpack.c.b16 %v588, %v585
        %v661 = vpack.c.b16 %v589, %v586
        %v662 = vpack.c.b16 %v593, %v590
        %v663 = vpack.c.b16 %v594, %v591
        %v664 = vpack.c.b16 %v595, %v592
        %v665 = vpack.c.b16 %v599, %v596
        %v666 = vpack.c.b16 %v600, %v597
        %v667 = vpack.c.b16 %v601, %v598
        %v668 = vpack.c.b16 %v605, %v602
        %v669 = vpack.c.b16 %v606, %v603
        %v670 = vpack.c.b16 %v607, %v604
        %v671 = vpack.c.b16 %v611, %v608
        %v672 = vpack.c.b16 %v612, %v609
        %v673 = vpack.c.b16 %v613, %v610
        %v674 = vpack.c.b16 %v617, %v614
        %v675 = vpack.c.b16 %v618, %v615
        %v676 = vpack.c.b16 %v619, %v616
        %v677 = vpack.c.b16 %v623, %v620
        %v678 = vpack.c.b16 %v624, %v621
        %v679 = vpack.c.b16 %v625, %v622
        %v680 = vpack.c.b16 %v629, %v626
        %v681 = vpack.c.b16 %v630, %v627
        %v682 = vpack.c.b16 %v631, %v628
        %v683 = vpack.c.b16 %v635, %v632
        %v684 = vpack.c.b16 %v636, %v633
        %v685 = vpack.c.b16 %v637, %v634
        %734 = vmatpush.bf16.msra.mxu0 %v659
        %735 = vmatpush.bf16.msra.mxu0 %v656
        %736 = vmatpush.bf16.msra.mxu0 %v653
        %737 = vmatpush.bf16.msra.mxu0 %v650
        %738 = vmatpush.bf16.msra.mxu0 %v647
        %739 = vmatpush.bf16.msra.mxu0 %v644
        %740 = vmatpush.bf16.msra.mxu0 %v641
        %741 = vmatpush.bf16.msra.mxu0 %v638
        %742 = vmatmul.bf16.gmra.mxu0 %v402
        %v743 = vpop.f32.mrf.mxu0
        %v744 = vadd.f32 %v472, %v743
        %v745 = vpop.f32.mrf.mxu0
        %v746 = vadd.f32 %v472, %v745
        %747 = vmatmul.bf16.gmra.mxu0 %v404
        %v748 = vpop.f32.mrf.mxu0
        %v749 = vadd.f32 %v472, %v748
        %v750 = vpop.f32.mrf.mxu0
        %v751 = vadd.f32 %v472, %v750
        %752 = vdwg.mxu0
        %753 = vmatpush.bf16.msra.mxu0 %v683
        %754 = vmatpush.bf16.msra.mxu0 %v680
        %755 = vmatpush.bf16.msra.mxu0 %v677
        %756 = vmatpush.bf16.msra.mxu0 %v674
        %757 = vmatpush.bf16.msra.mxu0 %v671
        %758 = vmatpush.bf16.msra.mxu0 %v668
        %759 = vmatpush.bf16.msra.mxu0 %v665
        %760 = vmatpush.bf16.msra.mxu0 %v662
        %761 = vmatmul.bf16.gmra.mxu0 %v403
        %v762 = vpop.f32.mrf.mxu0
        %v763 = vadd.f32 %v744, %v762
        %v764 = vpop.f32.mrf.mxu0
        %v765 = vadd.f32 %v746, %v764
        %766 = vmatmul.bf16.gmra.mxu0 %v405
        %v767 = vpop.f32.mrf.mxu0
        %v768 = vadd.f32 %v749, %v767
        %v769 = vpop.f32.mrf.mxu0
        %v770 = vadd.f32 %v751, %v769
        %771 = vdwg.mxu0
        %772 = vmatpush.bf16.msra.mxu0 %v660
        %773 = vmatpush.bf16.msra.mxu0 %v657
        %774 = vmatpush.bf16.msra.mxu0 %v654
        %775 = vmatpush.bf16.msra.mxu0 %v651
        %776 = vmatpush.bf16.msra.mxu0 %v648
        %777 = vmatpush.bf16.msra.mxu0 %v645
        %778 = vmatpush.bf16.msra.mxu0 %v642
        %779 = vmatpush.bf16.msra.mxu0 %v639
        %780 = vmatmul.bf16.gmra.mxu0 %v402
        %v781 = vpop.f32.mrf.mxu0
        %v782 = vadd.f32 %v473, %v781
        %v783 = vpop.f32.mrf.mxu0
        %v784 = vadd.f32 %v473, %v783
        %785 = vmatmul.bf16.gmra.mxu0 %v404
        %v786 = vpop.f32.mrf.mxu0
        %v787 = vadd.f32 %v473, %v786
        %v788 = vpop.f32.mrf.mxu0
        %v789 = vadd.f32 %v473, %v788
        %790 = vdwg.mxu0
        %791 = vmatpush.bf16.msra.mxu0 %v684
        %792 = vmatpush.bf16.msra.mxu0 %v681
        %793 = vmatpush.bf16.msra.mxu0 %v678
        %794 = vmatpush.bf16.msra.mxu0 %v675
        %795 = vmatpush.bf16.msra.mxu0 %v672
        %796 = vmatpush.bf16.msra.mxu0 %v669
        %797 = vmatpush.bf16.msra.mxu0 %v666
        %798 = vmatpush.bf16.msra.mxu0 %v663
        %799 = vmatmul.bf16.gmra.mxu0 %v403
        %v800 = vpop.f32.mrf.mxu0
        %v801 = vadd.f32 %v782, %v800
        %v802 = vpop.f32.mrf.mxu0
        %v803 = vadd.f32 %v784, %v802
        %804 = vmatmul.bf16.gmra.mxu0 %v405
        %v805 = vpop.f32.mrf.mxu0
        %v806 = vadd.f32 %v787, %v805
        %v807 = vpop.f32.mrf.mxu0
        %v808 = vadd.f32 %v789, %v807
        %809 = vdwg.mxu0
        %810 = vmatpush.bf16.msra.mxu0 %v661
        %811 = vmatpush.bf16.msra.mxu0 %v658
        %812 = vmatpush.bf16.msra.mxu0 %v655
        %813 = vmatpush.bf16.msra.mxu0 %v652
        %814 = vmatpush.bf16.msra.mxu0 %v649
        %815 = vmatpush.bf16.msra.mxu0 %v646
        %816 = vmatpush.bf16.msra.mxu0 %v643
        %817 = vmatpush.bf16.msra.mxu0 %v640
        %818 = vmatmul.bf16.gmra.mxu0 %v402
        %v819 = vpop.f32.mrf.mxu0
        %v820 = vadd.f32 %v474, %v819
        %v821 = vpop.f32.mrf.mxu0
        %v822 = vadd.f32 %v474, %v821
        %823 = vmatmul.bf16.gmra.mxu0 %v404
        %v824 = vpop.f32.mrf.mxu0
        %v825 = vadd.f32 %v474, %v824
        %v826 = vpop.f32.mrf.mxu0
        %v827 = vadd.f32 %v474, %v826
        %828 = vdwg.mxu0
        %829 = vmatpush.bf16.msra.mxu0 %v685
        %830 = vmatpush.bf16.msra.mxu0 %v682
        %831 = vmatpush.bf16.msra.mxu0 %v679
        %832 = vmatpush.bf16.msra.mxu0 %v676
        %833 = vmatpush.bf16.msra.mxu0 %v673
        %834 = vmatpush.bf16.msra.mxu0 %v670
        %835 = vmatpush.bf16.msra.mxu0 %v667
        %836 = vmatpush.bf16.msra.mxu0 %v664
        %837 = vmatmul.bf16.gmra.mxu0 %v403
        %v838 = vpop.f32.mrf.mxu0
        %v839 = vadd.f32 %v820, %v838
        %v840 = vpop.f32.mrf.mxu0
        %v841 = vadd.f32 %v822, %v840
        %842 = vmatmul.bf16.gmra.mxu0 %v405
        %v843 = vpop.f32.mrf.mxu0
        %v844 = vadd.f32 %v825, %v843
        %v845 = vpop.f32.mrf.mxu0
        %v846 = vadd.f32 %v827, %v845
        %847 = vdwg.mxu0
        %v848 = vmul.f32 %v763, 0.088388346
        %v849 = vmul.f32 %v765, 0.088388346
        %v850 = vmul.f32 %v768, 0.088388346
        %v851 = vmul.f32 %v770, 0.088388346
        %v852 = vld [vmem:[%s335] sm:$0xff]
        %v853 = vld [vmem:[%s335 + $0x8] sm:$0xff]
        %v854 = vld [vmem:[%s335 + $0x10] sm:$0xff]
        %v855 = vld [vmem:[%s335 + $0x18] sm:$0xff]
        %v856 = vld [vmem:[%s335 + $0x20] sm:$0xff]
        %v857 = vld [vmem:[%s335 + $0x28] sm:$0xff]
        %v858 = vld [vmem:[%s335 + $0x30] sm:$0xff]
        %v859 = vld [vmem:[%s335 + $0x38] sm:$0xff]
        %v860 = vld [vmem:[%s335 + $0x40] sm:$0xff]
        %v861 = vld [vmem:[%s335 + $0x48] sm:$0xff]
        %v862 = vld [vmem:[%s335 + $0x50] sm:$0xff]
        %v863 = vld [vmem:[%s335 + $0x58] sm:$0xff]
        %v864 = vld [vmem:[%s335 + $0x60] sm:$0xff]
        %v865 = vld [vmem:[%s335 + $0x68] sm:$0xff]
        %v866 = vld [vmem:[%s335 + $0x70] sm:$0xff]
        %v867 = vld [vmem:[%s335 + $0x78] sm:$0xff]
        %v868 = vpack.c.bf16 %v849, %v848
        %v869 = vpack.c.bf16 %v851, %v850
        %v870 = vpack.c.bf16 %v803, %v801
        %v871 = vpack.c.bf16 %v808, %v806
        %v872 = vpack.c.bf16 %v841, %v839
        %v873 = vpack.c.bf16 %v846, %v844
        %874 = vmatpush.bf16.xpose.msra.mxu0 0
        %875 = vmatpush.bf16.xpose.msra.mxu0 0
        %876 = vmatpush.bf16.xpose.msra.mxu0 0
        %877 = vmatpush.bf16.xpose.msra.mxu0 0
        %878 = vmatpush.bf16.xpose.msra.mxu0 0
        %879 = vmatpush.bf16.xpose.msra.mxu0 0
        %880 = vmatpush.bf16.xpose.msra.mxu0 %v871
        %881 = vmatpush.bf16.xpose.msra.mxu0 %v870
        %882 = vmatmul.bf16.gmra.mxu0 %v868
        %v883 = vpop.f32.mrf.mxu0
        %v884 = vadd.f32 0.0, %v883
        %v885 = vpop.f32.mrf.mxu0
        %v886 = vadd.f32 0.0, %v885
        %887 = vmatmul.bf16.gmra.mxu0 %v869
        %v888 = vpop.f32.mrf.mxu0
        %v889 = vadd.f32 0.0, %v888
        %v890 = vpop.f32.mrf.mxu0
        %v891 = vadd.f32 0.0, %v890
        %892 = vdwg.mxu0
        %vm893 = vcmask 261120
        %v894 = vsel %vm893, %v884, -inf
        %895 = vmax.xlane.f32.xlu0 %v894
        %v896 = vpop.xlane.xlu0 %895
        %v897 = vsel %vm893, %v886, -inf
        %898 = vmax.xlane.f32.xlu0 %v897
        %v899 = vpop.xlane.xlu0 %898
        %v900 = vsel %vm893, %v889, -inf
        %901 = vmax.xlane.f32.xlu0 %v900
        %v902 = vpop.xlane.xlu0 %901
        %v903 = vsel %vm893, %v891, -inf
        %904 = vmax.xlane.f32.xlu0 %v903
        %v905 = vpop.xlane.xlu0 %904
        %v906 = vsub.f32 %v884, %v896
        %v907 = vsub.f32 %v886, %v899
        %v908 = vsub.f32 %v889, %v902
        %v909 = vsub.f32 %v891, %v905
        %v910 = vmul.f32 %v906, 1.442695
        %v911 = vpow.pop %v910
        %v912 = vmul.f32 %v907, 1.442695
        %v913 = vpow.pop %v912
        %v914 = vmul.f32 %v908, 1.442695
        %v915 = vpow.pop %v914
        %v916 = vmul.f32 %v909, 1.442695
        %v917 = vpow.pop %v916
        %v918 = vsel %vm893, %v911, 0.0
        %919 = vadd.xlane.f32.xlu0 %v918
        %v920 = vpop.xlane.xlu0 %919
        %v921 = vsel %vm893, %v913, 0.0
        %922 = vadd.xlane.f32.xlu0 %v921
        %v923 = vpop.xlane.xlu0 %922
        %v924 = vsel %vm893, %v915, 0.0
        %925 = vadd.xlane.f32.xlu0 %v924
        %v926 = vpop.xlane.xlu0 %925
        %v927 = vsel %vm893, %v917, 0.0
        %928 = vadd.xlane.f32.xlu0 %v927
        %v929 = vpop.xlane.xlu0 %928
        %v930 = vrcp.pop %v920
        %v931 = vrcp.pop %v923
        %v932 = vrcp.pop %v926
        %v933 = vrcp.pop %v929
        %v934 = vmul.f32 %v911, %v930
        %v935 = vmul.f32 %v913, %v931
        %v936 = vmul.f32 %v915, %v932
        %v937 = vmul.f32 %v917, %v933
        %v938 = vpack.c.bf16 %v935, %v934
        %v939 = vpack.c.bf16 %v937, %v936
        %v941 = vsel %vm893, %v938, 0
        %v944 = vsel %vm893, %v939, 0
        %946 = vmatpush.bf16.msra.mxu0 0
        %947 = vmatpush.bf16.msra.mxu0 0
        %948 = vmatpush.bf16.msra.mxu0 0
        %949 = vmatpush.bf16.msra.mxu0 0
        %950 = vmatpush.bf16.msra.mxu0 0
        %951 = vmatpush.bf16.msra.mxu0 0
        %952 = vmatpush.bf16.msra.mxu0 %v873
        %953 = vmatpush.bf16.msra.mxu0 %v872
        %954 = vmatmul.bf16.gmra.mxu0 %v941
        %v955 = vpop.f32.mrf.mxu0
        %v956 = vadd.f32 0.0, %v955
        %v957 = vpop.f32.mrf.mxu0
        %v958 = vadd.f32 0.0, %v957
        %959 = vmatmul.bf16.gmra.mxu0 %v944
        %v960 = vpop.f32.mrf.mxu0
        %v961 = vadd.f32 0.0, %v960
        %v962 = vpop.f32.mrf.mxu0
        %v963 = vadd.f32 0.0, %v962
        %964 = vdwg.mxu0
        %v965 = vld [vmem:[#allocation2] sm:$0xff]
        %v966 = vld [vmem:[#allocation2 + $0x8] sm:$0xff]
        %v967 = vld [vmem:[#allocation2 + $0x10] sm:$0xff]
        %v968 = vld [vmem:[#allocation2 + $0x18] sm:$0xff]
        %v969 = vld [vmem:[#allocation2 + $0x20] sm:$0xff]
        %v970 = vld [vmem:[#allocation2 + $0x28] sm:$0xff]
        %v971 = vld [vmem:[#allocation2 + $0x30] sm:$0xff]
        %v972 = vld [vmem:[#allocation2 + $0x38] sm:$0xff]
        %v973 = vpack.c.bf16 %v958, %v956
        %v974 = vpack.c.bf16 %v963, %v961
        %v991 = vunpack.c.l.b16 %v852
        %v992 = vunpack.c.h.b16 %v852
        %v993 = vunpack.c.l.b16 %v853
        %v994 = vunpack.c.h.b16 %v853
        %v995 = vunpack.c.l.b16 %v854
        %v996 = vunpack.c.h.b16 %v854
        %v997 = vunpack.c.l.b16 %v855
        %v998 = vunpack.c.h.b16 %v855
        %v999 = vunpack.c.l.b16 %v856
        %v1000 = vunpack.c.h.b16 %v856
        %v1001 = vunpack.c.l.b16 %v857
        %v1002 = vunpack.c.h.b16 %v857
        %v1003 = vunpack.c.l.b16 %v858
        %v1004 = vunpack.c.h.b16 %v858
        %v1005 = vunpack.c.l.b16 %v859
        %v1006 = vunpack.c.h.b16 %v859
        %v1007 = vunpack.c.l.b16 %v860
        %v1008 = vunpack.c.h.b16 %v860
        %v1009 = vunpack.c.l.b16 %v861
        %v1010 = vunpack.c.h.b16 %v861
        %v1011 = vunpack.c.l.b16 %v862
        %v1012 = vunpack.c.h.b16 %v862
        %v1013 = vunpack.c.l.b16 %v863
        %v1014 = vunpack.c.h.b16 %v863
        %v1015 = vunpack.c.l.b16 %v864
        %v1016 = vunpack.c.h.b16 %v864
        %v1017 = vunpack.c.l.b16 %v865
        %v1018 = vunpack.c.h.b16 %v865
        %v1019 = vunpack.c.l.b16 %v866
        %v1020 = vunpack.c.h.b16 %v866
        %v1021 = vunpack.c.l.b16 %v867
        %v1022 = vunpack.c.h.b16 %v867
        %v1023 = vpack.c.b16 %v993, %v991
        %v1024 = vpack.c.b16 %v994, %v992
        %v1025 = vpack.c.b16 %v997, %v995
        %v1026 = vpack.c.b16 %v998, %v996
        %v1027 = vpack.c.b16 %v1001, %v999
        %v1028 = vpack.c.b16 %v1002, %v1000
        %v1029 = vpack.c.b16 %v1005, %v1003
        %v1030 = vpack.c.b16 %v1006, %v1004
        %v1031 = vpack.c.b16 %v1009, %v1007
        %v1032 = vpack.c.b16 %v1010, %v1008
        %v1033 = vpack.c.b16 %v1013, %v1011
        %v1034 = vpack.c.b16 %v1014, %v1012
        %v1035 = vpack.c.b16 %v1017, %v1015
        %v1036 = vpack.c.b16 %v1018, %v1016
        %v1037 = vpack.c.b16 %v1021, %v1019
        %v1038 = vpack.c.b16 %v1022, %v1020
        %1055 = vmatpush.bf16.msra.mxu0 %v1037
        %1056 = vmatpush.bf16.msra.mxu0 %v1035
        %1057 = vmatpush.bf16.msra.mxu0 %v1033
        %1058 = vmatpush.bf16.msra.mxu0 %v1031
        %1059 = vmatpush.bf16.msra.mxu0 %v1029
        %1060 = vmatpush.bf16.msra.mxu0 %v1027
        %1061 = vmatpush.bf16.msra.mxu0 %v1025
        %1062 = vmatpush.bf16.msra.mxu0 %v1023
        %1063 = vmatmul.bf16.gmra.mxu0 %v973
        %v1064 = vpop.f32.mrf.mxu0
        %v1065 = vadd.f32 0.0, %v1064
        %v1066 = vpop.f32.mrf.mxu0
        %v1067 = vadd.f32 0.0, %v1066
        %1068 = vmatmul.bf16.gmra.mxu0 %v974
        %v1069 = vpop.f32.mrf.mxu0
        %v1070 = vadd.f32 0.0, %v1069
        %v1071 = vpop.f32.mrf.mxu0
        %v1072 = vadd.f32 0.0, %v1071
        %1073 = vdwg.mxu0
        %1074 = vmatpush.bf16.msra.mxu0 %v1038
        %1075 = vmatpush.bf16.msra.mxu0 %v1036
        %1076 = vmatpush.bf16.msra.mxu0 %v1034
        %1077 = vmatpush.bf16.msra.mxu0 %v1032
        %1078 = vmatpush.bf16.msra.mxu0 %v1030
        %1079 = vmatpush.bf16.msra.mxu0 %v1028
        %1080 = vmatpush.bf16.msra.mxu0 %v1026
        %1081 = vmatpush.bf16.msra.mxu0 %v1024
        %1082 = vmatmul.bf16.gmra.mxu0 %v973
        %v1083 = vpop.f32.mrf.mxu0
        %v1084 = vadd.f32 0.0, %v1083
        %v1085 = vpop.f32.mrf.mxu0
        %v1086 = vadd.f32 0.0, %v1085
        %1087 = vmatmul.bf16.gmra.mxu0 %v974
        %v1088 = vpop.f32.mrf.mxu0
        %v1089 = vadd.f32 0.0, %v1088
        %v1090 = vpop.f32.mrf.mxu0
        %v1091 = vadd.f32 0.0, %v1090
        %1092 = vdwg.mxu0
        %v1093 = vadd.f32 %v965, %v1065
        %v1094 = vadd.f32 %v966, %v1084
        %v1095 = vadd.f32 %v967, %v1067
        %v1096 = vadd.f32 %v968, %v1086
        %v1097 = vadd.f32 %v969, %v1070
        %v1098 = vadd.f32 %v970, %v1089
        %v1099 = vadd.f32 %v971, %v1072
        %v1100 = vadd.f32 %v972, %v1091
        %1101 = vst [vmem:[#allocation2] sm:$0xff] %v1093
        %1102 = vst [vmem:[#allocation2 + $0x8] sm:$0xff] %v1094
        %1103 = vst [vmem:[#allocation2 + $0x10] sm:$0xff] %v1095
        %1104 = vst [vmem:[#allocation2 + $0x18] sm:$0xff] %v1096
        %1105 = vst [vmem:[#allocation2 + $0x20] sm:$0xff] %v1097
        %1106 = vst [vmem:[#allocation2 + $0x28] sm:$0xff] %v1098
        %1107 = vst [vmem:[#allocation2 + $0x30] sm:$0xff] %v1099
        %1108 = vst [vmem:[#allocation2 + $0x38] sm:$0xff] %v1100
        %p1109 = scmp.eq.s32.totalorder %s33, 1
        // Predicated region
        $region61: #{tpu_custom_call.1} parent=39 // pred_check
          %p1110 = pneg %p1109
        $region62: #{tpu_custom_call.1} parent=39 // pred_check_branch
          %1112 = sbr.rel (%p1110) target = $region64
        $region63: #{tpu_custom_call.1} parent=39 // pred_region
          %v1113 = vld [vmem:[#allocation2] sm:$0xff]
          %v1114 = vld [vmem:[#allocation2 + $0x8] sm:$0xff]
          %v1115 = vld [vmem:[#allocation2 + $0x10] sm:$0xff]
          %v1116 = vld [vmem:[#allocation2 + $0x18] sm:$0xff]
          %v1117 = vld [vmem:[#allocation2 + $0x20] sm:$0xff]
          %v1118 = vld [vmem:[#allocation2 + $0x28] sm:$0xff]
          %v1119 = vld [vmem:[#allocation2 + $0x30] sm:$0xff]
          %v1120 = vld [vmem:[#allocation2 + $0x38] sm:$0xff]
          %v1121 = vld [vmem:[%s4] sm:$0x3]
          %v1123 = vperm.slane %v1121, 0
          %v1124 = vperm.slane %v1121, 1
          %v1127 = vadd.f32 %v1113, %v1123
          %v1128 = vadd.f32 %v1114, %v1124
          %v1129 = vadd.f32 %v1115, %v1123
          %v1130 = vadd.f32 %v1116, %v1124
          %v1131 = vadd.f32 %v1117, %v1123
          %v1132 = vadd.f32 %v1118, %v1124
          %v1133 = vadd.f32 %v1119, %v1123
          %v1134 = vadd.f32 %v1120, %v1124
          %1135 = vst [vmem:[%s377] sm:$0xff] %v1127
          %1136 = vst [vmem:[%s377 + $0x8] sm:$0xff] %v1128
          %1137 = vst [vmem:[%s377 + $0x10] sm:$0xff] %v1129
          %1138 = vst [vmem:[%s377 + $0x18] sm:$0xff] %v1130
          %1139 = vst [vmem:[%s377 + $0x20] sm:$0xff] %v1131
          %1140 = vst [vmem:[%s377 + $0x28] sm:$0xff] %v1132
          %1141 = vst [vmem:[%s377 + $0x30] sm:$0xff] %v1133
          %1142 = vst [vmem:[%s377 + $0x38] sm:$0xff] %v1134
        $region64: #{tpu_custom_call.1} parent=39 // pred_fallthru
          _
        %s1143 = sand.u32 %s173, 1
        %s1144 = scalar_lea.sflag [#allocation5], %s1143
        %s1145 = sand.u32 %s173, 1
        %s1146 = smul.addr %s1145, 64
        %s1147 = scalar_lea.vmem [#allocation11], %s1146
        // Predicated region
        $region65: #{tpu_custom_call.1} parent=39 // pred_check
          %p1148 = pneg %p183
        $region66: #{tpu_custom_call.1} parent=39 // pred_check_branch
          %1150 = sbr.rel (%p1148) target = $region68
        $region67: #{tpu_custom_call.1} parent=39 // pred_region
          %1152 = vsyncadd %s1144, 0
          %s1153 = smul.addr %s32, 8
          %s1154 = smul.addr %s1153, 8
          %s1155 = scalar_lea.hbm %s5, %s1154
          %s1156 = sshll.u32 %s1147, 4
          %s1157 = int_to_ptr.vmem [resolvable:$true] %s1156
          %s1158 = sshll.u32 %s1155, 4
          %s1159 = int_to_ptr.hbm [resolvable:$true] %s1158
          %1164 = dma.vmem_to_hbm [thread:$0]  %s1157, 1024, %s1159, %s1144, 256, 256, 16
        $region68: #{tpu_custom_call.1} parent=39 // pred_fallthru
          _
      $region40: #{tpu_custom_call.1} parent=5 // pred_fallthru
        _
      %p1165 = scmp.le.s32.totalorder 2, %s23
      // Predicated region
      $region69: #{tpu_custom_call.1} parent=5 // pred_check
        %p1166 = pneg %p1165
      $region70: #{tpu_custom_call.1} parent=5 // pred_check_branch
        %1168 = sbr.rel (%p1166) target = $region72
      $region71: #{tpu_custom_call.1} parent=5 // pred_region
        %s1169 = ssub.s32 %s23, 2
        // Predicated region
        $region73: #{tpu_custom_call.1} parent=71 // pred_check
          %p1170 = pneg %p189
        $region74: #{tpu_custom_call.1} parent=71 // pred_check_branch
          %1172 = sbr.rel (%p1170) target = $region76
        $region75: #{tpu_custom_call.1} parent=71 // pred_region
          %s1173 = sand.u32 %s174, 1
          %s1174 = scalar_lea.sflag [#allocation5], %s1173
          %s1175 = sand.u32 %s174, 1
          %s1176 = smul.addr %s1175, 64
          %s1177 = scalar_lea.vmem [#allocation11], %s1176
          %1179 = dma.done %s1174, 1024
        $region76: #{tpu_custom_call.1} parent=71 // pred_fallthru
          _
      $region72: #{tpu_custom_call.1} parent=5 // pred_fallthru
        _
    $region6: #{tpu_custom_call.1} parent=1 // loop_footer
      %s27 = sadd.s32 1, %s23
    $region7: #{tpu_custom_call.1} parent=1 // loop_footer_branch
      %22 = sbr.rel target = $region3
    $region8: #{tpu_custom_call.1} parent=1 // loop_exit
      _
    %1180 = vsyncpa [#allocation4], 1
    %s1181 = scalar_lea.sflag [#allocation4], 1
    %1182 = vsyncpa %s1181, 1
    %1183 = vsyncpa [#allocation7], 1
    %s1184 = scalar_lea.sflag [#allocation7], 1
    %1185 = vsyncpa %s1184, 1
    %1186 = vsyncpa [#allocation10], 1
    %s1187 = scalar_lea.sflag [#allocation10], 1
    %1188 = vsyncpa %s1187, 1
    %1189 = vsyncpa [#allocation5], 1
    %s1190 = scalar_lea.sflag [#allocation5], 1
    %1191 = vsyncpa %s1190, 1

</llo_original>
